<compile_context>
chip_gen: v5e
topology: v5e:2x2
jax: 0.10.0
libtpu: 0.0.40
codegen_flags: <defaults>
</compile_context>

<pallas_src>
import jax
import jax.numpy as jnp
from jax.experimental import pallas as pl
from jax.experimental.pallas import tpu as pltpu


def _h_sigmoid_kernel(x_ref, o_ref):
    x = x_ref[...]
    # ReLU6(x + 3) * (1/6); python-float constants are weak-typed, so the whole
    # expression stays in x's dtype (bf16 stays bf16, f32 stays f32).
    o_ref[...] = jnp.clip(x + 3.0, 0.0, 6.0) * (1.0 / 6.0)


def _chip_config():
    """(block_bytes, vmem_limit_bytes, dimension_semantics) per TPU generation."""
    try:
        kind = jax.devices()[0].device_kind.lower()
    except Exception:  # pragma: no cover - non-TPU fallback
        kind = ""
    if "v7" in kind or "7x" in kind:
        # v7x: 3.2 TB/s HBM but only 64 MiB VMEM.  8 MiB tiles -> (in+out) x 2
        # buffers = 32 MiB; core-parallel shards the row-tile axis over both TCs.
        return 8 << 20, 56 << 20, (getattr(pltpu, "CORE_PARALLEL", "parallel"),)
    if "v6" in kind:
        # v6e: 128 MiB VMEM, 1.4 TB/s.  8 MiB tiles amortize per-step overhead.
        return 8 << 20, 96 << 20, ("parallel",)
    # v5e / unknown: already at the HBM roofline with 4 MiB tiles.
    return 4 << 20, 40 << 20, ("parallel",)


# Lane widths tried for the 2-D view (all multiples of 128 -> unmasked stores).
_COL_CANDIDATES = (1024, 512, 256, 128)


def h_sigmoid(x: jax.Array, *, donate: bool = False) -> jax.Array:
    """Elementwise hard-sigmoid: ReLU6(x + 3) / 6, any shape, dtype preserved.

    donate=True adds input_output_aliases={0: 0}; only use it when the caller
    does not reuse `x` (and donates the buffer at the jit boundary).
    """
    orig_shape = x.shape
    dtype = x.dtype
    n = int(x.size)
    if n == 0:
        return x

    itemsize = jnp.dtype(dtype).itemsize
    block_bytes, vmem_limit, dim_sems = _chip_config()

    io_alias = {0: 0} if donate else {}
    cost = pl.CostEstimate(
        flops=4 * n,             # add + 2 clip compares + mul
        transcendentals=0,
        bytes_accessed=2 * n * itemsize,
    )
    cparams = pltpu.CompilerParams(
        dimension_semantics=dim_sems,
        vmem_limit_bytes=vmem_limit,
    )

    flat = x.reshape(-1)  # contiguous flatten: no data movement

    cols = next((c for c in _COL_CANDIDATES if n % c == 0), None)

    if cols is not None:
        # Lane-dense 2-D path: (rows, cols) with cols a multiple of 128.
        rows = n // cols
        sub = max(8, 32 // itemsize)  # sublane multiple: f32->8, bf16->16, i8->32
        tr = max(sub, (block_bytes // (cols * itemsize)) // sub * sub)
        if rows <= tr:
            tr = rows                 # single full-extent block (any row count OK)
        x2d = flat.reshape(rows, cols)
        out = pl.pallas_call(
            _h_sigmoid_kernel,
            out_shape=jax.ShapeDtypeStruct((rows, cols), dtype),
            grid=(pl.cdiv(rows, tr),),            # ragged last row-tile is masked
            in_specs=[pl.BlockSpec((tr, cols), lambda i: (i, 0))],
            out_specs=pl.BlockSpec((tr, cols), lambda i: (i, 0)),
            compiler_params=cparams,
            cost_estimate=cost,
            input_output_aliases=io_alias,
        )(x2d)
        return out.reshape(orig_shape)

    # Ragged fallback (n not divisible by 128): flat 1-D view, cdiv grid; Pallas
    # pads the edge read and masks the edge write -- no padded copy, no slice.
    # Conservative ~1 MiB blocks: rank-1 vreg packing can be lane-sparse, so we
    # keep the per-block footprint small for this (rare) path.
    blk = max(1024, ((1 << 20) // itemsize) // 1024 * 1024)
    if n <= blk:
        blk = n                        # single full-extent block
    out = pl.pallas_call(
        _h_sigmoid_kernel,
        out_shape=jax.ShapeDtypeStruct((n,), dtype),
        grid=(pl.cdiv(n, blk),),
        in_specs=[pl.BlockSpec((blk,), lambda i: (i,))],
        out_specs=pl.BlockSpec((blk,), lambda i: (i,)),
        compiler_params=cparams,
        cost_estimate=cost,
        input_output_aliases=io_alias,
    )(flat)
    return out.reshape(orig_shape)


if __name__ == "__main__":
    key = jax.random.PRNGKey(0)

    # NCHW activation, small shape consistent with the tripcbam neck.
    x = jax.random.normal(key, (2, 4, 16, 16), dtype=jnp.float32) * 4.0
    y = jax.block_until_ready(h_sigmoid(x))
    y_ref = jnp.clip(x + 3.0, 0.0, 6.0) / 6.0
    assert y.shape == x.shape and y.dtype == x.dtype
    assert jnp.allclose(y, y_ref, atol=1e-6, rtol=1e-6)

    # Odd-sized input: exercises the no-pad ragged path.
    x2 = jax.random.normal(jax.random.PRNGKey(1), (2, 3, 7, 5), dtype=jnp.float32) * 4.0
    y2 = jax.block_until_ready(h_sigmoid(x2))
    y2_ref = jnp.clip(x2 + 3.0, 0.0, 6.0) / 6.0
    assert y2.shape == x2.shape and y2.dtype == x2.dtype
    assert jnp.allclose(y2, y2_ref, atol=1e-6, rtol=1e-6)

    print("KERNEL_OK")
</pallas_src>

<mosaic_0001>
module attributes {stable_mosaic.version = 11 : i64} {
  func.func @_h_sigmoid_kernel(%arg0: i32, %arg1: memref<2x1024xf32, #tpu.memory_space<vmem>>, %arg2: memref<2x1024xf32, #tpu.memory_space<vmem>>) attributes {dimension_semantics = [#tpu.dimension_semantics<parallel>], iteration_bounds = array<i64: 1>, scalar_prefetch = 0 : i64, scratch_operands = 0 : i64, tpu.core_type = #tpu.core_type<tc>, window_params = [{transform_indices = @transform_0, window_bounds = array<i64: 2, 1024>}, {transform_indices = @transform_1, window_bounds = array<i64: 2, 1024>}]} {
    %c0 = arith.constant 0 : index
    %c0_0 = arith.constant 0 : index
    %0 = vector.load %arg1[%c0, %c0_0] : memref<2x1024xf32, #tpu.memory_space<vmem>>, vector<2x1024xf32>
    %cst = arith.constant 3.000000e+00 : f32
    %1 = vector.broadcast %cst : f32 to vector<2x1024xf32>
    %2 = arith.addf %0, %1 : vector<2x1024xf32>
    %cst_1 = arith.constant 0.000000e+00 : f32
    %cst_2 = arith.constant 6.000000e+00 : f32
    %3 = vector.broadcast %cst_1 : f32 to vector<2x1024xf32>
    %4 = arith.maximumf %3, %2 : vector<2x1024xf32>
    %5 = vector.broadcast %cst_2 : f32 to vector<2x1024xf32>
    %6 = arith.minimumf %5, %4 : vector<2x1024xf32>
    %cst_3 = arith.constant 0.166666672 : f32
    %7 = vector.broadcast %cst_3 : f32 to vector<2x1024xf32>
    %8 = arith.mulf %6, %7 : vector<2x1024xf32>
    %c0_4 = arith.constant 0 : index
    %c0_5 = arith.constant 0 : index
    %9 = vector.load %arg2[%c0_4, %c0_5] : memref<2x1024xf32, #tpu.memory_space<vmem>>, vector<2x1024xf32>
    tpu.vector_store %arg2[%c0_4, %c0_5], %8 {strides = array<i32>} : memref<2x1024xf32, #tpu.memory_space<vmem>>, vector<2x1024xf32>,
    return
  }
  func.func @transform_0(%arg0: i32) -> (i32, i32) {
    %c0_i32 = arith.constant 0 : i32
    %c0_i32_0 = arith.constant 0 : i32
    return %arg0, %c0_i32 : i32, i32
  }
  func.func @transform_1(%arg0: i32) -> (i32, i32) {
    %c0_i32 = arith.constant 0 : i32
    %c0_i32_0 = arith.constant 0 : i32
    return %arg0, %c0_i32 : i32, i32
  }
}

</mosaic_0001>

<llo_original>
// kernel: tpu_custom_call.1
$region0: #{tpu_custom_call.1}
  #allocation0 [shape = 'u32[]', space=smem, size = 0x4, offset = 0x4, fixed_abs, tag = 'smem constant byte address 0x4 - core index']
  #allocation1 [shape = 'u32[72,128]{1,0:T(1,128)}', space=vmem, size = 0x9000, scoped, tag = 'internal scratch']
  %s0 = inlined_call_operand.hbm [shape: f32[2,1024], index: 0, kind: input, shape index: {}]
  %s1 = inlined_call_operand.hbm [shape: f32[2,1024], index: 1, kind: output, shape index: {}]
  %s2 = sld [smem:[#allocation0]]
  $region18: #{tpu_custom_call.1} parent=0
    _
  %s4 = ssub.s32 1, %s2
  %s5 = scalar_select 0, %s4, %s2
  $region1: #{tpu_custom_call.1} parent=0
    #allocation2 [shape = 'u8[8192]{0}', space=vmem, size = 0x2000, scoped, tag = 'input window, operand 0, single buffered']
    #allocation3 [shape = 's32[1]{0}', space=sflag, size = 0x4, scoped, tag = 'scoped memory for tpu_custom_call.1']
    #allocation4 [shape = 's32[1]{0}', space=sflag, size = 0x4, scoped, tag = 'scoped memory for tpu_custom_call.1']
    #allocation5 [shape = 'u8[8192]{0}', space=vmem, size = 0x2000, scoped, tag = 'output window, operand 0, single buffered']
    %6 = vsyncpa [#allocation3], 0
    %7 = vsyncpa [#allocation4], 0
    // Predicated region
    $region2: #{tpu_custom_call.1} parent=1 // pred_check
      _
    $region3: #{tpu_custom_call.1} parent=1 // pred_check_branch
      %9 = sbr.rel (0) target = $region5
    $region4: #{tpu_custom_call.1} parent=1 // pred_region
      %11 = vsyncadd [#allocation3], 0
      %s13 = sshll.u32 %s0, 4
      %s14 = int_to_ptr.hbm [resolvable:$true] %s13
      %s15 = sshll.u32 [#allocation2], 4
      %s16 = int_to_ptr.vmem [resolvable:$true] %s15
      %18 = dma.hbm_to_vmem [thread:$0]  %s14, 256, %s16, [#allocation3]
    $region5: #{tpu_custom_call.1} parent=1 // pred_fallthru
      _
    // Predicated region
    $region6: #{tpu_custom_call.1} parent=1 // pred_check
      _
    $region7: #{tpu_custom_call.1} parent=1 // pred_check_branch
      %20 = sbr.rel (0) target = $region9
    $region8: #{tpu_custom_call.1} parent=1 // pred_region
      %22 = dma.done [#allocation3], 256
    $region9: #{tpu_custom_call.1} parent=1 // pred_fallthru
      _
    %v23 = vld [vmem:[#allocation2] sm:$0xff]
    %v24 = vld [vmem:[#allocation2 + $0x8] sm:$0xff]
    %v25 = vadd.f32 %v23, 3.0
    %v26 = vadd.f32 %v24, 3.0
    %v27 = vmax.f32 %v25, 0.0
    %v28 = vmax.f32 %v26, 0.0
    %v29 = vmin.f32 %v27, 6.0
    %v30 = vmin.f32 %v28, 6.0
    %v31 = vmul.f32 %v29, 0.16666667
    %v32 = vmul.f32 %v30, 0.16666667
    %33 = vst [vmem:[#allocation5] sm:$0xff] %v31
    %34 = vst [vmem:[#allocation5 + $0x8] sm:$0xff] %v32
    // Predicated region
    $region10: #{tpu_custom_call.1} parent=1 // pred_check
      _
    $region11: #{tpu_custom_call.1} parent=1 // pred_check_branch
      %36 = sbr.rel (0) target = $region13
    $region12: #{tpu_custom_call.1} parent=1 // pred_region
      %38 = vsyncadd [#allocation4], 0
      %s40 = sshll.u32 [#allocation5], 4
      %s41 = int_to_ptr.vmem [resolvable:$true] %s40
      %s42 = sshll.u32 %s1, 4
      %s43 = int_to_ptr.hbm [resolvable:$true] %s42
      %45 = dma.vmem_to_hbm [thread:$0]  %s41, 256, %s43, [#allocation4]
    $region13: #{tpu_custom_call.1} parent=1 // pred_fallthru
      _
    // Predicated region
    $region14: #{tpu_custom_call.1} parent=1 // pred_check
      _
    $region15: #{tpu_custom_call.1} parent=1 // pred_check_branch
      %47 = sbr.rel (0) target = $region17
    $region16: #{tpu_custom_call.1} parent=1 // pred_region
      %49 = dma.done [#allocation4], 256
    $region17: #{tpu_custom_call.1} parent=1 // pred_fallthru
      _
    %50 = vsyncpa [#allocation3], 1
    %51 = vsyncpa [#allocation4], 1

</llo_original>
